<compile_context>
chip_gen: v7x
topology: tpu7x:2x2x1
jax: 0.10.0
libtpu: 0.0.40
codegen_flags: <defaults>
</compile_context>

<pallas_src>
import math

import jax
import jax.numpy as jnp
from jax import lax
from jax.experimental import pallas as pl
from jax.experimental.pallas import tpu as pltpu


_LANE = 128
_SUBLANE = 8
_VMEM_LIMIT = 48 * 1024 * 1024     # scoped-VMEM request (OK on v5e/v6e, < v7x's 64 MiB)
_CHUNK_BUDGET = 36 * 1024 * 1024   # target resident bytes per kernel instance


def _round_up(x, m):
    return (x + m - 1) // m * m


# ----------------------------------------------------------------------------
# Highway: Linear(input_dim, hidden) -> ReLU -> Linear(hidden, hidden) -> ReLU
# ----------------------------------------------------------------------------
def _highway_kernel(x_ref, w1_ref, b1_ref, w2_ref, b2_ref, out_ref):
    x = x_ref[...].astype(jnp.bfloat16)
    h = jnp.dot(x, w1_ref[...], preferred_element_type=jnp.float32) + b1_ref[...]
    h = jnp.maximum(h, 0.0)
    o = jnp.dot(h.astype(jnp.bfloat16), w2_ref[...],
                preferred_element_type=jnp.float32) + b2_ref[...]
    out_ref[...] = jnp.maximum(o, 0.0)


def highway_pallas(x2d, w1, b1, w2, b2, *, hidden_size):
    n, din = x2d.shape
    hp = w1.shape[1]                                     # lane-padded hidden
    # Row tile: multiple of 8, as large as the VMEM budget allows.
    fixed = 2 * 2 * (din * hp + hp * hp) + 2 * 4 * 2 * hp   # bf16 weights + f32 biases (x2 buf)
    per_row = 2 * 4 * (din + hp)                            # x + out blocks (f32, double-buffered)
    tm = min(_round_up(n, _SUBLANE), 2048)
    while tm > _SUBLANE and fixed + tm * per_row > _CHUNK_BUDGET:
        tm = _round_up(tm // 2, _SUBLANE)
    n_pad = _round_up(n, tm)
    xp = jnp.pad(x2d, ((0, n_pad - n), (0, 0))) if n_pad != n else x2d
    out = pl.pallas_call(
        _highway_kernel,
        out_shape=jax.ShapeDtypeStruct((n_pad, hp), jnp.float32),
        grid=(n_pad // tm,),
        in_specs=[
            pl.BlockSpec((tm, din), lambda i: (i, 0)),
            pl.BlockSpec((din, hp), lambda i: (0, 0)),
            pl.BlockSpec((1, hp), lambda i: (0, 0)),
            pl.BlockSpec((hp, hp), lambda i: (0, 0)),
            pl.BlockSpec((1, hp), lambda i: (0, 0)),
        ],
        out_specs=pl.BlockSpec((tm, hp), lambda i: (i, 0)),
        compiler_params=pltpu.CompilerParams(
            dimension_semantics=("parallel",),
            vmem_limit_bytes=_VMEM_LIMIT),
    )(xp, w1, b1, w2, b2)
    return out[:n, :hidden_size]


def highway_ref(x2d, w1, b1, w2, b2, *, hidden_size):
    h = jnp.maximum(x2d @ w1.astype(jnp.float32) + b1, 0.0)
    o = jnp.maximum(h @ w2.astype(jnp.float32) + b2, 0.0)
    return o[:, :hidden_size]


# ----------------------------------------------------------------------------
# GRU layer (PyTorch gate math, zero initial hidden).
#
# Packed params (built once at init, zero lane-padding to Hp = roundup(H,128)):
#   wih : (ndir, Din, 3*Hp)  bf16, gate order [r | z | n] along the last axis
#   whh : (ndir, Hp,  3*Hp)  bf16
#   bih, bhh : (ndir, 1, 3*Hp)  f32
# ----------------------------------------------------------------------------
def _gru_dir_kernel(x_ref, wih_ref, whh_ref, bih_ref, bhh_ref,
                    out_ref, hlast_ref, gx_ref, h_ref):
    """One direction (grid axis 0) of a GRU over one time chunk (grid axis 1)."""
    T, Bp, Hp = out_ref.shape
    H3 = 3 * Hp

    # Zero the carried hidden state at the first chunk of this direction.
    @pl.when(pl.program_id(1) == 0)
    def _init():
        h_ref[...] = jnp.zeros_like(h_ref)

    # Hoisted input projection: ONE big MXU matmul per chunk (b_ih folded in).
    x2 = x_ref[...].reshape(T * Bp, x_ref.shape[-1]).astype(jnp.bfloat16)
    gx = jnp.dot(x2, wih_ref[0], preferred_element_type=jnp.float32) + bih_ref[0]
    gx_ref[...] = gx.reshape(T, Bp, H3)

    bhh = jnp.broadcast_to(bhh_ref[0], (Bp, H3))   # hoisted out of the loop
    rev = pl.program_id(0)                         # 0: walk 0..T-1, 1: walk T-1..0

    def step(t, carry):
        lt = t + rev * (T - 1 - 2 * t)
        h = h_ref[...]
        # ONE fused (Bp,Hp)x(Hp,3Hp) recurrent matmul on the critical path.
        gh = jnp.dot(h.astype(jnp.bfloat16), whh_ref[0],
                     preferred_element_type=jnp.float32) + bhh
        gx_t = gx_ref[lt]                          # leading-axis, tile-aligned load
        r = jax.nn.sigmoid(gx_t[:, :Hp] + gh[:, :Hp])
        z = jax.nn.sigmoid(gx_t[:, Hp:2 * Hp] + gh[:, Hp:2 * Hp])
        n = jnp.tanh(gx_t[:, 2 * Hp:] + r * gh[:, 2 * Hp:])
        h_new = (1.0 - z) * n + z * h
        h_ref[...] = h_new
        out_ref[lt] = h_new                        # lane-dense (Bp, Hp) store
        return carry

    if T <= 4:
        unroll = T
    else:
        unroll = next(u for u in (4, 3, 2, 1) if T % u == 0)
    lax.fori_loop(0, T, step, 0, unroll=unroll)

    # Final hidden: only written (and flushed) on the last chunk of this direction.
    @pl.when(pl.program_id(1) == pl.num_programs(1) - 1)
    def _final():
        hlast_ref[0] = h_ref[...]


def _pick_time_chunk(S, Bp, Din, Hp, budget_bytes=_CHUNK_BUDGET):
    """Largest divisor T of S whose FULL resident VMEM fits the budget."""
    H3 = 3 * Hp
    fixed = (2 * 2 * (Din * H3 + Hp * H3)     # wih + whh blocks (bf16, double-buffered)
             + 2 * 2 * 4 * H3                 # bih + bhh blocks (f32, double-buffered)
             + 2 * 4 * Bp * Hp                # hlast block (double-buffered)
             + 4 * Bp * Hp)                   # h scratch

    def per_chunk(T):
        return (2 * 4 * T * Bp * Din          # x block (f32, double-buffered)
                + 2 * 4 * T * Bp * Hp         # out block (f32, double-buffered)
                + 2 * 4 * T * Bp * H3)        # gx scratch + projection transient

    for T in range(S, 0, -1):
        if S % T == 0 and fixed + per_chunk(T) <= budget_bytes:
            return T
    return 1


def gru_pallas(x, wih, whh, bih, bhh, *, bidirectional, hidden_size, time_chunk=None):
    """x: (S, B, Din) f32.  Returns (out (S, B, ndir*H), h_last (ndir, B, H))."""
    S, B, Din = x.shape
    ndir = 2 if bidirectional else 1
    Hp = whh.shape[1]
    H = hidden_size
    assert wih.shape == (ndir, Din, 3 * Hp) and whh.shape == (ndir, Hp, 3 * Hp)

    Bp = _round_up(B, _SUBLANE)
    xp = jnp.pad(x, ((0, 0), (0, Bp - B), (0, 0))) if Bp != B else x

    if time_chunk is not None and S % time_chunk == 0:
        T = time_chunk
    else:
        T = _pick_time_chunk(S, Bp, Din, Hp)
    nc = S // T

    # Backward direction (d=1) streams the same x, chunk order reversed.
    def tblk(d, i):
        return i + d * (nc - 1 - 2 * i)

    out, hlast = pl.pallas_call(
        _gru_dir_kernel,
        grid=(ndir, nc),
        in_specs=[
            pl.BlockSpec((T, Bp, Din), lambda d, i: (tblk(d, i), 0, 0)),
            pl.BlockSpec((1, Din, 3 * Hp), lambda d, i: (d, 0, 0)),
            pl.BlockSpec((1, Hp, 3 * Hp), lambda d, i: (d, 0, 0)),
            pl.BlockSpec((1, 1, 3 * Hp), lambda d, i: (d, 0, 0)),
            pl.BlockSpec((1, 1, 3 * Hp), lambda d, i: (d, 0, 0)),
        ],
        out_specs=[
            # Both directions write disjoint lane-blocks of ONE fused output.
            pl.BlockSpec((T, Bp, Hp), lambda d, i: (tblk(d, i), 0, d)),
            pl.BlockSpec((1, Bp, Hp), lambda d, i: (d, 0, 0)),
        ],
        out_shape=[
            jax.ShapeDtypeStruct((S, Bp, ndir * Hp), jnp.float32),
            jax.ShapeDtypeStruct((ndir, Bp, Hp), jnp.float32),
        ],
        scratch_shapes=[
            pltpu.VMEM((T, Bp, 3 * Hp), jnp.float32),   # hoisted input projection
            pltpu.VMEM((Bp, Hp), jnp.float32),          # carried hidden state
        ],
        compiler_params=pltpu.CompilerParams(
            # directions are independent (v7x: one per TensorCore); time carries state
            dimension_semantics=("parallel", "arbitrary"),
            vmem_limit_bytes=_VMEM_LIMIT),
    )(xp, wih, whh, bih, bhh)

    h_last = hlast[:, :B, :H]
    if ndir == 1:
        return out[:, :B, :H], h_last
    if Hp == H and Bp == B:
        return out, h_last               # already (S, B, 2H): [fwd | bwd], no concat
    return jnp.concatenate([out[:, :B, :H], out[:, :B, Hp:Hp + H]], axis=-1), h_last


def gru_ref(x, wih, whh, bih, bhh, *, bidirectional, hidden_size, time_chunk=None):
    S, B, Din = x.shape
    ndir = 2 if bidirectional else 1
    Hp = whh.shape[1]
    H = hidden_size
    wih32 = wih.astype(jnp.float32)
    whh32 = whh.astype(jnp.float32)

    def run_dir(xd, d):
        def step(h, x_t):
            gx = x_t @ wih32[d] + bih[d]
            gh = h @ whh32[d] + bhh[d]
            r = jax.nn.sigmoid(gx[:, :Hp] + gh[:, :Hp])
            z = jax.nn.sigmoid(gx[:, Hp:2 * Hp] + gh[:, Hp:2 * Hp])
            n = jnp.tanh(gx[:, 2 * Hp:] + r * gh[:, 2 * Hp:])
            h_new = (1.0 - z) * n + z * h
            return h_new, h_new
        h_last, out = lax.scan(step, jnp.zeros((B, Hp), jnp.float32), xd)
        return out, h_last

    out_f, h_f = run_dir(x, 0)
    if ndir == 1:
        return out_f[:, :, :H], h_f[None, :, :H]
    out_b, h_b = run_dir(jnp.flip(x, 0), 1)
    out_b = jnp.flip(out_b, 0)
    out = jnp.concatenate([out_f[:, :, :H], out_b[:, :, :H]], axis=-1)
    return out, jnp.stack([h_f[:, :H], h_b[:, :H]], axis=0)


# ----------------------------------------------------------------------------
# Parameter init / packing + Encoder composition.
# ----------------------------------------------------------------------------
def _uniform(key, shape, bound):
    return jax.random.uniform(key, shape, jnp.float32, -bound, bound)


def _pack_gru_params(key, ndir, din, h, hp, bound):
    """PyTorch-style GRU params, gate-packed [r|z|n] along a lane-padded 3*hp axis."""
    kih, khh, kbi, kbh = jax.random.split(key, 4)
    wih = _uniform(kih, (ndir, 3, din, h), bound)
    whh = _uniform(khh, (ndir, 3, h, h), bound)
    bih = _uniform(kbi, (ndir, 3, h), bound)
    bhh = _uniform(kbh, (ndir, 3, h), bound)

    def pack_w(w, rows_p):
        w = jnp.pad(w, ((0, 0), (0, 0), (0, rows_p - w.shape[2]), (0, hp - h)))
        return jnp.transpose(w, (0, 2, 1, 3)).reshape(ndir, rows_p, 3 * hp)

    def pack_b(b):
        return jnp.pad(b, ((0, 0), (0, 0), (0, hp - h))).reshape(ndir, 1, 3 * hp)

    return (pack_w(wih, din).astype(jnp.bfloat16),
            pack_w(whh, hp).astype(jnp.bfloat16),
            pack_b(bih), pack_b(bhh))


class Encoder:
    def __init__(self, input_dim, hidden_dim, num_layers=1, with_context=False, key=None):
        if key is None:
            key = jax.random.PRNGKey(0)
        self.input_dim = input_dim
        self.hidden_dim = hidden_dim
        self.num_layers = num_layers
        self.with_context = with_context
        hp = _round_up(hidden_dim, _LANE)

        keys = jax.random.split(key, 3 + num_layers)

        # highway = Linear(input_dim, hidden) -> ReLU -> Linear(hidden, hidden) -> ReLU
        b1 = 1.0 / math.sqrt(input_dim)
        b2 = 1.0 / math.sqrt(hidden_dim)
        k1a, k1b, k2a, k2b = jax.random.split(keys[0], 4)
        w1 = _uniform(k1a, (input_dim, hidden_dim), b1)
        bb1 = _uniform(k1b, (hidden_dim,), b1)
        w2 = _uniform(k2a, (hidden_dim, hidden_dim), b2)
        bb2 = _uniform(k2b, (hidden_dim,), b2)
        pad_h = hp - hidden_dim
        self.hw_params = (
            jnp.pad(w1, ((0, 0), (0, pad_h))).astype(jnp.bfloat16),
            jnp.pad(bb1, (0, pad_h)).reshape(1, hp),
            jnp.pad(w2, ((0, pad_h), (0, pad_h))).astype(jnp.bfloat16),
            jnp.pad(bb2, (0, pad_h)).reshape(1, hp),
        )

        # optional context GRU: nn.GRU(input_dim, input_dim, 1, batch_first=True)
        if with_context:
            dp = _round_up(input_dim, _LANE)
            self.ctx_params = _pack_gru_params(
                keys[1], 1, input_dim, input_dim, dp, 1.0 / math.sqrt(input_dim))
        else:
            self.ctx_params = None

        # bidirectional GRU stack: nn.GRU(hidden, hidden, bidirectional=True, num_layers)
        bh = 1.0 / math.sqrt(hidden_dim)
        self.rnn_params = []
        for layer in range(num_layers):
            d_in = hidden_dim if layer == 0 else 2 * hidden_dim
            self.rnn_params.append(
                _pack_gru_params(keys[3 + layer], 2, d_in, hidden_dim, hp, bh))

    def __call__(self, x, use_pallas=True):
        hw = highway_pallas if use_pallas else highway_ref
        gru = gru_pallas if use_pallas else gru_ref

        if self.with_context:
            S, B, C, D = x.shape
            xc = jnp.transpose(x.reshape(S * B, C, D), (1, 0, 2))   # time-major (C, S*B, D)
            _, ctx_h = gru(xc, *self.ctx_params, bidirectional=False, hidden_size=D)
            x = ctx_h[0].reshape(S, B, D)                           # last context step

        S, B, D = x.shape
        h = hw(x.reshape(S * B, D), *self.hw_params,
               hidden_size=self.hidden_dim).reshape(S, B, self.hidden_dim)

        layer_in = h
        hiddens = []
        for layer in range(self.num_layers):
            out, h_last = gru(layer_in, *self.rnn_params[layer],
                              bidirectional=True, hidden_size=self.hidden_dim)
            hiddens.append(h_last)          # (2, B, H): [fwd final, bwd final]
            layer_in = out                  # (S, B, 2H)
            # TODO(synk): inter-layer GRU dropout (p=0.2) is train-only; eval identity here.

        output = layer_in                                   # (S, B, 2H)
        hidden = jnp.concatenate(hiddens, axis=0)           # (2*num_layers, B, H)
        # nn.Dropout(0.1) is identity in eval()/inference; reproduced as identity.
        return output, hidden


# ----------------------------------------------------------------------------
if __name__ == "__main__":
    key = jax.random.PRNGKey(0)
    kparam, kx, kparam2, kx2, kx3 = jax.random.split(key, 5)
    TOL = dict(atol=2e-2, rtol=2e-2)   # bf16 MXU operands vs f32 reference math

    # Case 1: with_context=False, x: (seq=8, batch=2, input_dim=16), hidden=32
    S, B, D, H = 8, 2, 16, 32
    enc = Encoder(D, H, num_layers=1, with_context=False, key=kparam)
    x = jax.random.normal(kx, (S, B, D), jnp.float32)

    out, hid = enc(x, use_pallas=True)
    out = jax.block_until_ready(out)
    hid = jax.block_until_ready(hid)
    out_ref, hid_ref = enc(x, use_pallas=False)
    assert out.shape == (S, B, 2 * H) and hid.shape == (2, B, H)
    assert jnp.allclose(out, out_ref, **TOL)
    assert jnp.allclose(hid, hid_ref, **TOL)

    # Case 2: with_context=True, x: (seq=4, batch=2, context=3, input_dim=8), hidden=16
    S2, B2, C2, D2, H2 = 4, 2, 3, 8, 16
    enc2 = Encoder(D2, H2, num_layers=1, with_context=True, key=kparam2)
    x2 = jax.random.normal(kx2, (S2, B2, C2, D2), jnp.float32)

    out2, hid2 = enc2(x2, use_pallas=True)
    out2 = jax.block_until_ready(out2)
    hid2 = jax.block_until_ready(hid2)
    out2_ref, hid2_ref = enc2(x2, use_pallas=False)
    assert out2.shape == (S2, B2, 2 * H2) and hid2.shape == (2, B2, H2)
    assert jnp.allclose(out2, out2_ref, **TOL)
    assert jnp.allclose(hid2, hid2_ref, **TOL)

    # Case 3: multi-chunk recurrence carry (forced time_chunk < S) + odd batch.
    x3 = jax.random.normal(kx3, (S, 3, H), jnp.float32)
    out3, hid3 = gru_pallas(x3, *enc.rnn_params[0], bidirectional=True,
                            hidden_size=H, time_chunk=2)
    out3 = jax.block_until_ready(out3)
    out3_ref, hid3_ref = gru_ref(x3, *enc.rnn_params[0], bidirectional=True,
                                 hidden_size=H)
    assert jnp.allclose(out3, out3_ref, **TOL)
    assert jnp.allclose(hid3, hid3_ref, **TOL)

    print("KERNEL_OK")
</pallas_src>

<mosaic_0001>
module attributes {stable_mosaic.version = 11 : i64} {
  func.func @_highway_kernel(%arg0: i32, %arg1: memref<16x16xf32, #tpu.memory_space<vmem>>, %arg2: memref<16x128xbf16, #tpu.memory_space<vmem>>, %arg3: memref<1x128xf32, #tpu.memory_space<vmem>>, %arg4: memref<128x128xbf16, #tpu.memory_space<vmem>>, %arg5: memref<1x128xf32, #tpu.memory_space<vmem>>, %arg6: memref<16x128xf32, #tpu.memory_space<vmem>>) attributes {dimension_semantics = [#tpu.dimension_semantics<parallel>], iteration_bounds = array<i64: 1>, scalar_prefetch = 0 : i64, scratch_operands = 0 : i64, tpu.core_type = #tpu.core_type<tc>, window_params = [{transform_indices = @transform_0, window_bounds = array<i64: 16, 16>}, {pipeline_mode = #tpu.pipeline_mode<synchronous>, transform_indices = @transform_1, window_bounds = array<i64: 16, 128>}, {pipeline_mode = #tpu.pipeline_mode<synchronous>, transform_indices = @transform_2, window_bounds = array<i64: 1, 128>}, {pipeline_mode = #tpu.pipeline_mode<synchronous>, transform_indices = @transform_3, window_bounds = array<i64: 128, 128>}, {pipeline_mode = #tpu.pipeline_mode<synchronous>, transform_indices = @transform_4, window_bounds = array<i64: 1, 128>}, {transform_indices = @transform_5, window_bounds = array<i64: 16, 128>}]} {
    %c0 = arith.constant 0 : index
    %c0_0 = arith.constant 0 : index
    %0 = vector.load %arg1[%c0, %c0_0] : memref<16x16xf32, #tpu.memory_space<vmem>>, vector<16x16xf32>
    %1 = arith.truncf %0 : vector<16x16xf32> to vector<16x16xbf16>
    %c0_1 = arith.constant 0 : index
    %c0_2 = arith.constant 0 : index
    %2 = vector.load %arg2[%c0_1, %c0_2] : memref<16x128xbf16, #tpu.memory_space<vmem>>, vector<16x128xbf16>
    %cst = arith.constant dense<0.000000e+00> : vector<16x128xf32>
    %3 = tpu.matmul %1, %2, %cst {dimension_numbers = #tpu.dot_dimension_numbers<[1], [0], [0], [1], [0, 0, 1, 1], [], []>} : vector<16x16xbf16>, vector<16x128xbf16>, vector<16x128xf32> -> vector<16x128xf32>
    %c0_3 = arith.constant 0 : index
    %c0_4 = arith.constant 0 : index
    %4 = vector.load %arg3[%c0_3, %c0_4] : memref<1x128xf32, #tpu.memory_space<vmem>>, vector<1x128xf32>
    %5 = vector.broadcast %4 : vector<1x128xf32> to vector<16x128xf32>
    %6 = arith.addf %3, %5 : vector<16x128xf32>
    %cst_5 = arith.constant 0.000000e+00 : f32
    %7 = vector.broadcast %cst_5 : f32 to vector<16x128xf32>
    %8 = arith.maximumf %6, %7 : vector<16x128xf32>
    %9 = arith.truncf %8 : vector<16x128xf32> to vector<16x128xbf16>
    %c0_6 = arith.constant 0 : index
    %c0_7 = arith.constant 0 : index
    %10 = vector.load %arg4[%c0_6, %c0_7] : memref<128x128xbf16, #tpu.memory_space<vmem>>, vector<128x128xbf16>
    %cst_8 = arith.constant dense<0.000000e+00> : vector<16x128xf32>
    %11 = tpu.matmul %9, %10, %cst_8 {dimension_numbers = #tpu.dot_dimension_numbers<[1], [0], [0], [1], [0, 0, 1, 1], [], []>} : vector<16x128xbf16>, vector<128x128xbf16>, vector<16x128xf32> -> vector<16x128xf32>
    %c0_9 = arith.constant 0 : index
    %c0_10 = arith.constant 0 : index
    %12 = vector.load %arg5[%c0_9, %c0_10] : memref<1x128xf32, #tpu.memory_space<vmem>>, vector<1x128xf32>
    %13 = vector.broadcast %12 : vector<1x128xf32> to vector<16x128xf32>
    %14 = arith.addf %11, %13 : vector<16x128xf32>
    %cst_11 = arith.constant 0.000000e+00 : f32
    %15 = vector.broadcast %cst_11 : f32 to vector<16x128xf32>
    %16 = arith.maximumf %14, %15 : vector<16x128xf32>
    %c0_12 = arith.constant 0 : index
    %c0_13 = arith.constant 0 : index
    %17 = vector.load %arg6[%c0_12, %c0_13] : memref<16x128xf32, #tpu.memory_space<vmem>>, vector<16x128xf32>
    tpu.vector_store %arg6[%c0_12, %c0_13], %16 {strides = array<i32>} : memref<16x128xf32, #tpu.memory_space<vmem>>, vector<16x128xf32>,
    return
  }
  func.func @transform_0(%arg0: i32) -> (i32, i32) {
    %c0_i32 = arith.constant 0 : i32
    %c0_i32_0 = arith.constant 0 : i32
    return %arg0, %c0_i32 : i32, i32
  }
  func.func @transform_1(%arg0: i32) -> (i32, i32) {
    %c0_i32 = arith.constant 0 : i32
    %c0_i32_0 = arith.constant 0 : i32
    %c0_i32_1 = arith.constant 0 : i32
    return %c0_i32, %c0_i32_0 : i32, i32
  }
  func.func @transform_2(%arg0: i32) -> (i32, i32) {
    %c0_i32 = arith.constant 0 : i32
    %c0_i32_0 = arith.constant 0 : i32
    %c0_i32_1 = arith.constant 0 : i32
    return %c0_i32, %c0_i32_0 : i32, i32
  }
  func.func @transform_3(%arg0: i32) -> (i32, i32) {
    %c0_i32 = arith.constant 0 : i32
    %c0_i32_0 = arith.constant 0 : i32
    %c0_i32_1 = arith.constant 0 : i32
    return %c0_i32, %c0_i32_0 : i32, i32
  }
  func.func @transform_4(%arg0: i32) -> (i32, i32) {
    %c0_i32 = arith.constant 0 : i32
    %c0_i32_0 = arith.constant 0 : i32
    %c0_i32_1 = arith.constant 0 : i32
    return %c0_i32, %c0_i32_0 : i32, i32
  }
  func.func @transform_5(%arg0: i32) -> (i32, i32) {
    %c0_i32 = arith.constant 0 : i32
    %c0_i32_0 = arith.constant 0 : i32
    return %arg0, %c0_i32 : i32, i32
  }
}

</mosaic_0001>

<llo_original>
// kernel: tpu_custom_call.1
$region0: #{tpu_custom_call.1}
  #allocation0 [shape = 'u32[]', space=smem, size = 0x4, offset = 0x4, fixed_abs, tag = 'smem constant byte address 0x4 - core index']
  #allocation1 [shape = 'u32[144,128]{1,0:T(1,128)}', space=vmem, size = 0x12000, scoped, tag = 'internal scratch']
  %s0 = inlined_call_operand.hbm [shape: f32[16,16], index: 0, kind: input, shape index: {}]
  %s1 = inlined_call_operand.hbm [shape: bf16[16,128], index: 1, kind: input, shape index: {}]
  %s2 = inlined_call_operand.vmem [shape: f32[1,128], index: 2, kind: input, shape index: {}]
  %s3 = inlined_call_operand.hbm [shape: bf16[128,128], index: 3, kind: input, shape index: {}]
  %s4 = inlined_call_operand.vmem [shape: f32[1,128], index: 4, kind: input, shape index: {}]
  %s5 = inlined_call_operand.hbm [shape: f32[16,128], index: 5, kind: output, shape index: {}]
  %s6 = sld [smem:[#allocation0]]
  $region42: #{tpu_custom_call.1} parent=0
    _
  %s8 = ssub.s32 1, %s6
  %s9 = scalar_select 0, %s8, %s6
  $region1: #{tpu_custom_call.1} parent=0
    #allocation2 [shape = 'u8[8192]{0}', space=vmem, size = 0x2000, scoped, tag = 'input window, operand 0, single buffered']
    #allocation3 [shape = 's32[1]{0}', space=sflag, size = 0x4, scoped, tag = 'scoped memory for tpu_custom_call.1']
    #allocation4 [shape = 's32[1]{0}', space=sflag, size = 0x4, scoped, tag = 'scoped memory for tpu_custom_call.1']
    #allocation5 [shape = 'u8[4096]{0}', space=vmem, size = 0x1000, scoped, tag = 'input window, operand 1, single buffered']
    #allocation6 [shape = 's32[1]{0}', space=sflag, size = 0x4, scoped, tag = 'scoped memory for tpu_custom_call.1']
    #allocation7 [shape = 'u8[32768]{0}', space=vmem, size = 0x8000, scoped, tag = 'input window, operand 3, single buffered']
    #allocation8 [shape = 'u8[8192]{0}', space=vmem, size = 0x2000, scoped, tag = 'output window, operand 0, single buffered']
    %10 = vsyncpa [#allocation3], 0
    %11 = vsyncpa [#allocation6], 0
    %12 = vsyncpa [#allocation4], 0
    // Predicated region
    $region2: #{tpu_custom_call.1} parent=1 // pred_check
      _
    $region3: #{tpu_custom_call.1} parent=1 // pred_check_branch
      %14 = sbr.rel (0) target = $region5
    $region4: #{tpu_custom_call.1} parent=1 // pred_region
      %s16 = ssub.s32 256, 256
      %17 = vsyncadd [#allocation3], %s16
      %s18 = sshll.u32 [#allocation2], 4
      %s19 = int_to_ptr.vmem [resolvable:$true] %s18
      %24 = dma.hbm_to_vmem [thread:$0]  %s0, 256, %s19, [#allocation3], 128, 128, 8
    $region5: #{tpu_custom_call.1} parent=1 // pred_fallthru
      _
    // Predicated region
    $region6: #{tpu_custom_call.1} parent=1 // pred_check
      _
    $region7: #{tpu_custom_call.1} parent=1 // pred_check_branch
      %26 = sbr.rel (0) target = $region9
    $region8: #{tpu_custom_call.1} parent=1 // pred_region
      %s28 = ssub.s32 128, 128
      %29 = vsyncadd [#allocation6], %s28
      %s30 = sshll.u32 [#allocation5], 4
      %s31 = int_to_ptr.vmem [resolvable:$true] %s30
      %36 = dma.hbm_to_vmem [thread:$0]  %s1, 128, %s31, [#allocation6], 64, 64, 4
    $region9: #{tpu_custom_call.1} parent=1 // pred_fallthru
      _
    // Predicated region
    $region10: #{tpu_custom_call.1} parent=1 // pred_check
      _
    $region11: #{tpu_custom_call.1} parent=1 // pred_check_branch
      %38 = sbr.rel (0) target = $region13
    $region12: #{tpu_custom_call.1} parent=1 // pred_region
      _
    $region13: #{tpu_custom_call.1} parent=1 // pred_fallthru
      _
    // Predicated region
    $region14: #{tpu_custom_call.1} parent=1 // pred_check
      _
    $region15: #{tpu_custom_call.1} parent=1 // pred_check_branch
      %40 = sbr.rel (0) target = $region17
    $region16: #{tpu_custom_call.1} parent=1 // pred_region
      %s42 = ssub.s32 1024, 1024
      %43 = vsyncadd [#allocation6], %s42
      %s44 = sshll.u32 [#allocation7], 4
      %s45 = int_to_ptr.vmem [resolvable:$true] %s44
      %50 = dma.hbm_to_vmem [thread:$0]  %s3, 1024, %s45, [#allocation6], 64, 64, 4
    $region17: #{tpu_custom_call.1} parent=1 // pred_fallthru
      _
    // Predicated region
    $region18: #{tpu_custom_call.1} parent=1 // pred_check
      _
    $region19: #{tpu_custom_call.1} parent=1 // pred_check_branch
      %52 = sbr.rel (0) target = $region21
    $region20: #{tpu_custom_call.1} parent=1 // pred_region
      _
    $region21: #{tpu_custom_call.1} parent=1 // pred_fallthru
      _
    // Predicated region
    $region22: #{tpu_custom_call.1} parent=1 // pred_check
      _
    $region23: #{tpu_custom_call.1} parent=1 // pred_check_branch
      %54 = sbr.rel (0) target = $region25
    $region24: #{tpu_custom_call.1} parent=1 // pred_region
      %55 = dma.done [#allocation3], 256
    $region25: #{tpu_custom_call.1} parent=1 // pred_fallthru
      _
    // Predicated region
    $region26: #{tpu_custom_call.1} parent=1 // pred_check
      _
    $region27: #{tpu_custom_call.1} parent=1 // pred_check_branch
      %57 = sbr.rel (0) target = $region29
    $region28: #{tpu_custom_call.1} parent=1 // pred_region
      %58 = dma.done [#allocation6], 128
    $region29: #{tpu_custom_call.1} parent=1 // pred_fallthru
      _
    // Predicated region
    $region30: #{tpu_custom_call.1} parent=1 // pred_check
      _
    $region31: #{tpu_custom_call.1} parent=1 // pred_check_branch
      %60 = sbr.rel (0) target = $region33
    $region32: #{tpu_custom_call.1} parent=1 // pred_region
      %61 = dma.done [#allocation6], 1024
    $region33: #{tpu_custom_call.1} parent=1 // pred_fallthru
      _
    %v63 = vld [vmem:[#allocation2] sm:$0xff]
    %v64 = vld [vmem:[#allocation2 + $0x8] sm:$0xff]
    %v65 = vpack.c.bf16 %v64, %v63
    %v66 = vld [vmem:[#allocation5] sm:$0xf]
    %v67 = vld [vmem:[#allocation5 + $0x4] sm:$0xf]
    %v68 = vld [vmem:[%s2] sm:$0x1]
    %v70 = vlaneseq
    %v71 = vshrl.u32 %v70, 7
    %v72 = vsub.s32 0, %v71
    %v73 = vrot.slane %v68, %v72
    %v77 = vunpack.c.l.b16 %v66
    %v78 = vunpack.c.l.b16 %v67
    %v79 = vpack.c.b16 %v78, %v77
    %vm81 = vcmask 130048
    %v83 = vsel %vm81, %v65, 0
    %85 = vmatprep.subr.bf16.mxu0 0
    %86 = vmatpush1.bf16.msra.mxu0 %v79
    %87 = vmatprep.subr.bf16.mxu0 0
    %88 = vmatpush1.bf16.msra.mxu0 0
    %89 = vmatprep.subr.bf16.mxu0 0
    %90 = vmatpush1.bf16.msra.mxu0 0
    %91 = vmatprep.subr.bf16.mxu0 0
    %92 = vmatpush1.bf16.msra.mxu0 0
    %93 = vmatprep.subr.bf16.mxu0 0
    %94 = vmatpush1.bf16.msra.mxu0 0
    %95 = vmatprep.subr.bf16.mxu0 0
    %96 = vmatpush1.bf16.msra.mxu0 0
    %97 = vmatprep.subr.bf16.mxu0 0
    %98 = vmatpush1.bf16.msra.mxu0 0
    %99 = vmatprep.subr.bf16.mxu0 0
    %100 = vmatpush1.bf16.msra.mxu0 0
    %101 = vmatprep.subr.bf16.mxu0 0
    %102 = vmatpush1.bf16.msra.mxu0 0
    %103 = vmatprep.subr.bf16.mxu0 0
    %104 = vmatpush1.bf16.msra.mxu0 0
    %105 = vmatprep.subr.bf16.mxu0 0
    %106 = vmatpush1.bf16.msra.mxu0 0
    %107 = vmatprep.subr.bf16.mxu0 0
    %108 = vmatpush1.bf16.msra.mxu0 0
    %109 = vmatprep.subr.bf16.mxu0 0
    %110 = vmatpush1.bf16.msra.mxu0 0
    %111 = vmatprep.subr.bf16.mxu0 0
    %112 = vmatpush1.bf16.msra.mxu0 0
    %113 = vmatprep.subr.bf16.mxu0 0
    %114 = vmatpush1.bf16.msra.mxu0 0
    %115 = vmatprep.subr.bf16.mxu0 0
    %116 = vmatpush1.bf16.msra.mxu0 0
    %117 = vmatprep.mubr.bf16.mxu0 0
    %118 = vmatmul.mubr.bf16.gmra.mrb[0].mxu0 %v83
    %v119 = vpop.f32.mrb[0].mxu0
    %v120 = vadd.f32 %v73, %v119
    %v121 = vpop.f32.mrb[0].mxu0
    %v122 = vpop.f32.mrb[0].mxu0
    %v123 = vadd.f32 %v73, %v122
    %v124 = vpop.f32.mrb[0].mxu0
    %125 = vdwg.mxu0
    %v126 = vmax.f32 %v120, 0.0
    %v127 = vmax.f32 %v123, 0.0
    %v128 = vpack.c.bf16 %v127, %v126
    %v129 = vld [vmem:[#allocation7] sm:$0xf]
    %v130 = vld [vmem:[#allocation7 + $0x4] sm:$0xf]
    %v131 = vld [vmem:[#allocation7 + $0x8] sm:$0xf]
    %v132 = vld [vmem:[#allocation7 + $0xc] sm:$0xf]
    %v133 = vld [vmem:[#allocation7 + $0x10] sm:$0xf]
    %v134 = vld [vmem:[#allocation7 + $0x14] sm:$0xf]
    %v135 = vld [vmem:[#allocation7 + $0x18] sm:$0xf]
    %v136 = vld [vmem:[#allocation7 + $0x1c] sm:$0xf]
    %v137 = vld [vmem:[#allocation7 + $0x20] sm:$0xf]
    %v138 = vld [vmem:[#allocation7 + $0x24] sm:$0xf]
    %v139 = vld [vmem:[#allocation7 + $0x28] sm:$0xf]
    %v140 = vld [vmem:[#allocation7 + $0x2c] sm:$0xf]
    %v141 = vld [vmem:[#allocation7 + $0x30] sm:$0xf]
    %v142 = vld [vmem:[#allocation7 + $0x34] sm:$0xf]
    %v143 = vld [vmem:[#allocation7 + $0x38] sm:$0xf]
    %v144 = vld [vmem:[#allocation7 + $0x3c] sm:$0xf]
    %v145 = vld [vmem:[%s4] sm:$0x1]
    %v147 = vlaneseq
    %v148 = vshrl.u32 %v147, 7
    %v149 = vsub.s32 0, %v148
    %v150 = vrot.slane %v145, %v149
    %v168 = vunpack.c.l.b16 %v129
    %v169 = vunpack.c.l.b16 %v130
    %v170 = vunpack.c.l.b16 %v131
    %v171 = vunpack.c.l.b16 %v132
    %v172 = vunpack.c.l.b16 %v133
    %v173 = vunpack.c.l.b16 %v134
    %v174 = vunpack.c.l.b16 %v135
    %v175 = vunpack.c.l.b16 %v136
    %v176 = vunpack.c.l.b16 %v137
    %v177 = vunpack.c.l.b16 %v138
    %v178 = vunpack.c.l.b16 %v139
    %v179 = vunpack.c.l.b16 %v140
    %v180 = vunpack.c.l.b16 %v141
    %v181 = vunpack.c.l.b16 %v142
    %v182 = vunpack.c.l.b16 %v143
    %v183 = vunpack.c.l.b16 %v144
    %v184 = vpack.c.b16 %v169, %v168
    %v185 = vpack.c.b16 %v171, %v170
    %v186 = vpack.c.b16 %v173, %v172
    %v187 = vpack.c.b16 %v175, %v174
    %v188 = vpack.c.b16 %v177, %v176
    %v189 = vpack.c.b16 %v179, %v178
    %v190 = vpack.c.b16 %v181, %v180
    %v191 = vpack.c.b16 %v183, %v182
    %200 = vmatprep.subr.bf16.mxu0 0
    %201 = vmatpush1.bf16.msra.mxu0 %v184
    %202 = vmatprep.subr.bf16.mxu0 0
    %203 = vmatpush1.bf16.msra.mxu0 %v185
    %204 = vmatprep.subr.bf16.mxu0 0
    %205 = vmatpush1.bf16.msra.mxu0 %v186
    %206 = vmatprep.subr.bf16.mxu0 0
    %207 = vmatpush1.bf16.msra.mxu0 %v187
    %208 = vmatprep.subr.bf16.mxu0 0
    %209 = vmatpush1.bf16.msra.mxu0 %v188
    %210 = vmatprep.subr.bf16.mxu0 0
    %211 = vmatpush1.bf16.msra.mxu0 %v189
    %212 = vmatprep.subr.bf16.mxu0 0
    %213 = vmatpush1.bf16.msra.mxu0 %v190
    %214 = vmatprep.subr.bf16.mxu0 0
    %215 = vmatpush1.bf16.msra.mxu0 %v191
    %216 = vmatprep.subr.bf16.mxu0 0
    %217 = vmatpush1.bf16.msra.mxu0 0
    %218 = vmatprep.subr.bf16.mxu0 0
    %219 = vmatpush1.bf16.msra.mxu0 0
    %220 = vmatprep.subr.bf16.mxu0 0
    %221 = vmatpush1.bf16.msra.mxu0 0
    %222 = vmatprep.subr.bf16.mxu0 0
    %223 = vmatpush1.bf16.msra.mxu0 0
    %224 = vmatprep.subr.bf16.mxu0 0
    %225 = vmatpush1.bf16.msra.mxu0 0
    %226 = vmatprep.subr.bf16.mxu0 0
    %227 = vmatpush1.bf16.msra.mxu0 0
    %228 = vmatprep.subr.bf16.mxu0 0
    %229 = vmatpush1.bf16.msra.mxu0 0
    %230 = vmatprep.subr.bf16.mxu0 0
    %231 = vmatpush1.bf16.msra.mxu0 0
    %232 = vmatprep.mubr.bf16.mxu0 0
    %233 = vmatmul.mubr.bf16.gmra.mrb[0].mxu0 %v128
    %v234 = vpop.f32.mrb[0].mxu0
    %v235 = vadd.f32 %v150, %v234
    %v236 = vpop.f32.mrb[0].mxu0
    %v237 = vpop.f32.mrb[0].mxu0
    %v238 = vadd.f32 %v150, %v237
    %v239 = vpop.f32.mrb[0].mxu0
    %240 = vdwg.mxu0
    %v241 = vmax.f32 %v235, 0.0
    %v242 = vmax.f32 %v238, 0.0
    %243 = vst [vmem:[#allocation8] sm:$0xff] %v241
    %244 = vst [vmem:[#allocation8 + $0x8] sm:$0xff] %v242
    // Predicated region
    $region34: #{tpu_custom_call.1} parent=1 // pred_check
      _
    $region35: #{tpu_custom_call.1} parent=1 // pred_check_branch
      %246 = sbr.rel (0) target = $region37
    $region36: #{tpu_custom_call.1} parent=1 // pred_region
      %s248 = ssub.s32 256, 256
      %249 = vsyncadd [#allocation4], %s248
      %s250 = sshll.u32 [#allocation8], 4
      %s251 = int_to_ptr.vmem [resolvable:$true] %s250
      %256 = dma.vmem_to_hbm [thread:$0]  %s251, 256, %s5, [#allocation4], 128, 128, 8
    $region37: #{tpu_custom_call.1} parent=1 // pred_fallthru
      _
    // Predicated region
    $region38: #{tpu_custom_call.1} parent=1 // pred_check
      _
    $region39: #{tpu_custom_call.1} parent=1 // pred_check_branch
      %258 = sbr.rel (0) target = $region41
    $region40: #{tpu_custom_call.1} parent=1 // pred_region
      %259 = dma.done [#allocation4], 256
    $region41: #{tpu_custom_call.1} parent=1 // pred_fallthru
      _
    %260 = vsyncpa [#allocation3], 1
    %261 = vsyncpa [#allocation6], 1
    %262 = vsyncpa [#allocation4], 1

</llo_original>
